<compile_context>
chip_gen: v7x
topology: tpu7x:2x2x1
jax: 0.10.0
libtpu: 0.0.40
codegen_flags: <defaults>
</compile_context>

<pallas_src>
import functools

import jax
import jax.numpy as jnp
from jax import lax
from jax.experimental import pallas as pl
from jax.experimental.pallas import tpu as pltpu

F32 = jnp.float32
BF16 = jnp.bfloat16
NEG_INF = -1e9


def _dot(a, b):
    return jnp.dot(a, b, preferred_element_type=F32)


def _full_spec(shape):
    """Whole-array VMEM block (constant block index across the grid)."""
    zeros = (0,) * len(shape)
    return pl.BlockSpec(shape, lambda i, _z=zeros: _z)


def _pick_row_block(n, max_block=512):
    """Largest candidate (multiple of 16, <= max_block) dividing n, else n."""
    for cand in (max_block, 256, 128, 64, 32, 16):
        if cand <= n and n % cand == 0:
            return cand
    return n


def _vmem_limit_bytes():
    cap = 64 * 1024 * 1024  # conservative default = v7x per-TC physical VMEM
    try:
        cap = int(getattr(pltpu.get_tpu_info(), "vmem_capacity_bytes", cap))
    except Exception:
        pass
    # ~3/4 of physical, capped: ~48 MiB on v7x, ~96 MiB on v5e/v6e.
    return int(min(cap * 3 // 4, 100 * 1024 * 1024))


# ----------------------------------------------------------------------------
# Kernels
# ----------------------------------------------------------------------------
def _embed_kernel(x_ref, ew1_ref, eb1_ref, ew2_ref, eb2_ref, ews_ref, ebs_ref,
                  h_ref):
    # MLP(input_dim, hid, hid, skip=True): 2-layer ReLU MLP + linear skip.
    x = x_ref[...]                                           # [blk, in] bf16
    t = jnp.maximum(_dot(x, ew1_ref[...]) + eb1_ref[...], 0.0)
    h = _dot(t.astype(BF16), ew2_ref[...]) + eb2_ref[...]
    h = h + _dot(x, ews_ref[...]) + ebs_ref[...]
    h_ref[...] = h


def _qk_proj_kernel(h_ref, wq_ref, bq_ref, wk_ref, bk_ref, q_ref, k_ref,
                    *, num_heads):
    # Hoisted per-layer Q/K projection (runs once over N, not once per row
    # block of the attention grid).  Per-head weights keep the output in
    # [H, N, d] layout so the attention kernel only leading-axis-indexes.
    # 1/sqrt(d) is already folded into wq/bq host-side.
    hb = h_ref[...]                                          # [blk, hid] bf16
    for hd in range(num_heads):
        q_ref[hd] = (_dot(hb, wq_ref[hd]) + bq_ref[hd]).astype(q_ref.dtype)
        k_ref[hd] = (_dot(hb, wk_ref[hd]) + bk_ref[hd]).astype(k_ref.dtype)


def _attn_layer_kernel(h_kv_ref, h_res_ref, q_ref, k_ref, mask_ref,
                       wvo_ref, battn_ref,
                       wf1_ref, bf1_ref, wf2_ref, bf2_ref,
                       out_ref, *, num_heads):
    # One AttentionLayer + outer residual, for one block of query rows.
    h_kv = h_kv_ref[...]                                     # [N, hid] bf16
    mask = mask_ref[...].astype(F32)                         # [blk, N] (cast once)

    # Per-head masked attention.  Value/output projection reassociated:
    #   p @ (h Wv Wo + 1 bv Wo)  ==  (p @ h) Wv Wo  +  bv Wo   (rows of p sum to 1)
    # so the constant bias (bo + sum_h bv_h Wo_h) is pre-folded into battn.
    a = battn_ref[...]                                       # [1, hid] f32
    for hd in range(num_heads):
        s = lax.dot_general(
            q_ref[hd], k_ref[hd],                            # [blk,d] x [N,d]
            dimension_numbers=(((1,), (1,)), ((), ())),
            preferred_element_type=F32)                      # [blk, N]
        s = s + mask                                         # additive bias, f32
        s = s - jnp.max(s, axis=-1, keepdims=True)
        p = jnp.exp(s)
        denom = jnp.sum(p, axis=-1, keepdims=True)
        p = p * pl.reciprocal(denom, approx=True)            # EUP, not VALU
        ctx = _dot(p.astype(BF16), h_kv)                     # [blk, hid]
        a = a + _dot(ctx.astype(BF16), wvo_ref[hd])          # [blk, hid]

    # Position-wise feed-forward (hid -> 2*hid -> hid).
    t = jnp.maximum(_dot(a.astype(BF16), wf1_ref[...]) + bf1_ref[...], 0.0)
    f = _dot(t.astype(BF16), wf2_ref[...]) + bf2_ref[...]

    # Residual from the outer forward: h = l(G, h) + h.
    out_ref[...] = f + h_res_ref[...]


def _decision_kernel(*refs, num_pieces):
    # JumpingKnowledge('cat') + first decision linear, fused:
    #   cat([h0..hL]) @ W1 == sum_l h_l @ W1[l]
    hs = refs[:num_pieces]
    dw1_ref, db1_ref, dw2_ref, db2_ref, out_ref = refs[num_pieces:]
    dec = db1_ref[...]                                       # [1, hid]
    for l in range(num_pieces):
        dec = dec + _dot(hs[l][...], dw1_ref[l])
    dec = jnp.maximum(dec, 0.0)
    out_ref[...] = _dot(dec.astype(BF16), dw2_ref[...]) + db2_ref[...]


# ----------------------------------------------------------------------------
# Parameters
# ----------------------------------------------------------------------------
def init_params(key, input_dim, hidden_dim, output_dim, num_layers, num_heads):
    assert hidden_dim % num_heads == 0
    head_dim = hidden_dim // num_heads
    keys = iter(jax.random.split(key, 64))

    def w(shape):
        return (0.1 * jax.random.normal(next(keys), shape)).astype(F32)

    L, H, hid, d = num_layers, num_heads, hidden_dim, head_dim
    params = [
        # embed MLP (skip=True)
        w((input_dim, hid)), w((1, hid)),
        w((hid, hid)), w((1, hid)),
        w((input_dim, hid)), w((1, hid)),
        # attention layers (leading axis L, per-head split on the weight side)
        w((L, H, hid, d)), w((L, H, 1, d)),        # Wq, bq
        w((L, H, hid, d)), w((L, H, 1, d)),        # Wk, bk
        w((L, H, hid, d)), w((L, H, 1, d)),        # Wv, bv
        w((L, H, d, hid)), w((L, 1, hid)),         # Wo (per head), bo
        w((L, hid, 2 * hid)), w((L, 1, 2 * hid)),  # FF1
        w((L, 2 * hid, hid)), w((L, 1, hid)),      # FF2
        # decision MLP  (first weight split per JK piece: [L+1, hid, hid])
        w((L + 1, hid, hid)), w((1, hid)),
        w((hid, output_dim)), w((1, output_dim)),
    ]
    return params


# ----------------------------------------------------------------------------
# Forward
# ----------------------------------------------------------------------------
def edge_property_prediction_model3(x, adj, params, *, num_layers, num_heads,
                                    hidden_dim, output_dim):
    n, in_dim = x.shape
    head_dim = hidden_dim // num_heads
    blk = _pick_row_block(n)
    assert n % blk == 0
    grid = (n // blk,)

    cparams = pltpu.CompilerParams(
        dimension_semantics=("parallel",),
        vmem_limit_bytes=_vmem_limit_bytes(),
    )

    (ew1, eb1, ew2, eb2, ews, ebs,
     wq, bq, wk, bk, wv, bv, wo, bo,
     wf1, bf1, wf2, bf2,
     dw1, db1, dw2, db2) = params

    bf = lambda a: a.astype(BF16)

    # ---- host-side (once per forward, outside the grid loops) ----
    # Fold the 1/sqrt(d) score scale into Wq/bq.
    scale = jnp.float32(1.0 / (head_dim ** 0.5))
    wq_bf = bf(wq * scale)                               # [L, H, hid, d]
    bq_s = bq * scale                                    # [L, H, 1, d]  f32
    wk_bf = bf(wk)                                       # [L, H, hid, d]

    # Fold per-head V projection and output projection (exact, matmul assoc.):
    #   (h @ Wv + bv) @ Wo == h @ (Wv @ Wo) + bv @ Wo
    wvo_bf = bf(jnp.einsum('lhid,lhdo->lhio', wv, wo))   # [L, H, hid, hid]
    bvo = jnp.einsum('lhxd,lhdo->lhxo', bv, wo)          # [L, H, 1,  hid]
    # With softmax rows summing to 1, p @ (1 bvo) == bvo, so the whole bias of
    # the attention output collapses to a constant folded with bo.
    b_attn = bo + jnp.sum(bvo, axis=1)                   # [L, 1, hid] f32

    wf1_bf, wf2_bf = bf(wf1), bf(wf2)
    dw1_bf = bf(dw1)

    # Hoisted additive attention mask, stored bf16 (halves its DMA/VMEM);
    # the score add stays in f32 in-kernel.
    mask_bias = jnp.where(adj > 0, 0.0, NEG_INF).astype(BF16)

    # Lane-dense final output: pad decision output columns to a multiple of 128.
    out_pad = max(128, ((output_dim + 127) // 128) * 128)
    dw2p_bf = bf(jnp.zeros((hidden_dim, out_pad), F32).at[:, :output_dim].set(dw2))
    db2p = jnp.zeros((1, out_pad), F32).at[:, :output_dim].set(db2)

    xb = bf(x)

    # ---- embed layer ----
    h = pl.pallas_call(
        _embed_kernel,
        out_shape=jax.ShapeDtypeStruct((n, hidden_dim), F32),
        grid=grid,
        in_specs=[
            pl.BlockSpec((blk, in_dim), lambda i: (i, 0)),
            _full_spec(ew1.shape), _full_spec(eb1.shape),
            _full_spec(ew2.shape), _full_spec(eb2.shape),
            _full_spec(ews.shape), _full_spec(ebs.shape),
        ],
        out_specs=pl.BlockSpec((blk, hidden_dim), lambda i: (i, 0)),
        compiler_params=cparams,
    )(xb, bf(ew1), eb1, bf(ew2), eb2, bf(ews), ebs)

    # ---- message-passing layers ----
    hs_bf = []
    qk_kernel = functools.partial(_qk_proj_kernel, num_heads=num_heads)
    attn_kernel = functools.partial(_attn_layer_kernel, num_heads=num_heads)

    for l in range(num_layers):
        h_bf = bf(h)            # host-side bf16 copy: K/V side + JK piece
        hs_bf.append(h_bf)

        # Hoisted per-layer Q/K projection (once over N, not once per block).
        q_all, k_all = pl.pallas_call(
            qk_kernel,
            out_shape=(jax.ShapeDtypeStruct((num_heads, n, head_dim), BF16),
                       jax.ShapeDtypeStruct((num_heads, n, head_dim), BF16)),
            grid=grid,
            in_specs=[
                pl.BlockSpec((blk, hidden_dim), lambda i: (i, 0)),
                _full_spec((num_heads, hidden_dim, head_dim)),
                _full_spec((num_heads, 1, head_dim)),
                _full_spec((num_heads, hidden_dim, head_dim)),
                _full_spec((num_heads, 1, head_dim)),
            ],
            out_specs=(
                pl.BlockSpec((num_heads, blk, head_dim), lambda i: (0, i, 0)),
                pl.BlockSpec((num_heads, blk, head_dim), lambda i: (0, i, 0)),
            ),
            compiler_params=cparams,
        )(h_bf, wq_bf[l], bq_s[l], wk_bf[l], bk[l])

        h = pl.pallas_call(
            attn_kernel,
            out_shape=jax.ShapeDtypeStruct((n, hidden_dim), F32),
            grid=grid,
            in_specs=[
                _full_spec((n, hidden_dim)),                      # h (bf16, K/V side)
                pl.BlockSpec((blk, hidden_dim), lambda i: (i, 0)),  # h residual (f32)
                pl.BlockSpec((num_heads, blk, head_dim),
                             lambda i: (0, i, 0)),                # Q rows
                _full_spec((num_heads, n, head_dim)),             # K (full)
                pl.BlockSpec((blk, n), lambda i: (i, 0)),         # mask rows (bf16)
                _full_spec((num_heads, hidden_dim, hidden_dim)),  # Wv@Wo per head
                _full_spec((1, hidden_dim)),                      # folded bias
                _full_spec((hidden_dim, 2 * hidden_dim)),
                _full_spec((1, 2 * hidden_dim)),
                _full_spec((2 * hidden_dim, hidden_dim)),
                _full_spec((1, hidden_dim)),
            ],
            out_specs=pl.BlockSpec((blk, hidden_dim), lambda i: (i, 0)),
            compiler_params=cparams,
        )(h_bf, h, q_all, k_all, mask_bias,
          wvo_bf[l], b_attn[l], wf1_bf[l], bf1[l], wf2_bf[l], bf2[l])

    hs_bf.append(bf(h))
    num_pieces = num_layers + 1

    # ---- JumpingKnowledge('cat') + decision MLP (no jnp.stack copy) ----
    dec_in_specs = (
        [pl.BlockSpec((blk, hidden_dim), lambda i: (i, 0))
         for _ in range(num_pieces)]
        + [_full_spec(dw1_bf.shape), _full_spec(db1.shape),
           _full_spec(dw2p_bf.shape), _full_spec(db2p.shape)]
    )
    out = pl.pallas_call(
        functools.partial(_decision_kernel, num_pieces=num_pieces),
        out_shape=jax.ShapeDtypeStruct((n, out_pad), F32),
        grid=grid,
        in_specs=dec_in_specs,
        out_specs=pl.BlockSpec((blk, out_pad), lambda i: (i, 0)),
        compiler_params=cparams,
    )(*hs_bf, dw1_bf, db1, dw2p_bf, db2p)

    return out[:, :output_dim]


# ----------------------------------------------------------------------------
if __name__ == "__main__":
    N, IN_DIM, HID, OUT_DIM, L, HEADS = 16, 8, 32, 1, 4, 4

    key = jax.random.PRNGKey(0)
    kx, kadj, kp = jax.random.split(key, 3)

    x = jax.random.normal(kx, (N, IN_DIM), dtype=jnp.float32)

    # deterministic symmetric adjacency with self-loops
    m = (jax.random.uniform(kadj, (N, N)) < 0.3).astype(jnp.float32)
    adj = jnp.maximum(m, m.T)
    adj = jnp.maximum(adj, jnp.eye(N, dtype=jnp.float32))

    params = init_params(kp, IN_DIM, HID, OUT_DIM, L, HEADS)

    out = edge_property_prediction_model3(
        x, adj, params,
        num_layers=L, num_heads=HEADS, hidden_dim=HID, output_dim=OUT_DIM)
    out = jax.block_until_ready(out)

    assert out.shape == (N, OUT_DIM), out.shape
    assert bool(jnp.all(jnp.isfinite(out)))
    print("KERNEL_OK")
</pallas_src>

<mosaic_0001>
module attributes {stable_mosaic.version = 11 : i64} {
  func.func @_embed_kernel(%arg0: i32, %arg1: memref<16x8xbf16, #tpu.memory_space<vmem>>, %arg2: memref<8x32xbf16, #tpu.memory_space<vmem>>, %arg3: memref<1x32xf32, #tpu.memory_space<vmem>>, %arg4: memref<32x32xbf16, #tpu.memory_space<vmem>>, %arg5: memref<1x32xf32, #tpu.memory_space<vmem>>, %arg6: memref<8x32xbf16, #tpu.memory_space<vmem>>, %arg7: memref<1x32xf32, #tpu.memory_space<vmem>>, %arg8: memref<16x32xf32, #tpu.memory_space<vmem>>) attributes {dimension_semantics = [#tpu.dimension_semantics<parallel>], iteration_bounds = array<i64: 1>, scalar_prefetch = 0 : i64, scratch_operands = 0 : i64, tpu.core_type = #tpu.core_type<tc>, window_params = [{transform_indices = @transform_0, window_bounds = array<i64: 16, 8>}, {pipeline_mode = #tpu.pipeline_mode<synchronous>, transform_indices = @transform_1, window_bounds = array<i64: 8, 32>}, {pipeline_mode = #tpu.pipeline_mode<synchronous>, transform_indices = @transform_2, window_bounds = array<i64: 1, 32>}, {pipeline_mode = #tpu.pipeline_mode<synchronous>, transform_indices = @transform_3, window_bounds = array<i64: 32, 32>}, {pipeline_mode = #tpu.pipeline_mode<synchronous>, transform_indices = @transform_4, window_bounds = array<i64: 1, 32>}, {pipeline_mode = #tpu.pipeline_mode<synchronous>, transform_indices = @transform_5, window_bounds = array<i64: 8, 32>}, {pipeline_mode = #tpu.pipeline_mode<synchronous>, transform_indices = @transform_6, window_bounds = array<i64: 1, 32>}, {transform_indices = @transform_7, window_bounds = array<i64: 16, 32>}]} {
    %c0 = arith.constant 0 : index
    %c0_0 = arith.constant 0 : index
    %0 = vector.load %arg1[%c0, %c0_0] : memref<16x8xbf16, #tpu.memory_space<vmem>>, vector<16x8xbf16>
    %c0_1 = arith.constant 0 : index
    %c0_2 = arith.constant 0 : index
    %1 = vector.load %arg2[%c0_1, %c0_2] : memref<8x32xbf16, #tpu.memory_space<vmem>>, vector<8x32xbf16>
    %cst = arith.constant dense<0.000000e+00> : vector<16x32xf32>
    %2 = tpu.matmul %0, %1, %cst {dimension_numbers = #tpu.dot_dimension_numbers<[1], [0], [0], [1], [0, 0, 1, 1], [], []>} : vector<16x8xbf16>, vector<8x32xbf16>, vector<16x32xf32> -> vector<16x32xf32>
    %c0_3 = arith.constant 0 : index
    %c0_4 = arith.constant 0 : index
    %3 = vector.load %arg3[%c0_3, %c0_4] : memref<1x32xf32, #tpu.memory_space<vmem>>, vector<1x32xf32>
    %4 = vector.broadcast %3 : vector<1x32xf32> to vector<16x32xf32>
    %5 = arith.addf %2, %4 : vector<16x32xf32>
    %cst_5 = arith.constant 0.000000e+00 : f32
    %6 = vector.broadcast %cst_5 : f32 to vector<16x32xf32>
    %7 = arith.maximumf %5, %6 : vector<16x32xf32>
    %8 = arith.truncf %7 : vector<16x32xf32> to vector<16x32xbf16>
    %c0_6 = arith.constant 0 : index
    %c0_7 = arith.constant 0 : index
    %9 = vector.load %arg4[%c0_6, %c0_7] : memref<32x32xbf16, #tpu.memory_space<vmem>>, vector<32x32xbf16>
    %cst_8 = arith.constant dense<0.000000e+00> : vector<16x32xf32>
    %10 = tpu.matmul %8, %9, %cst_8 {dimension_numbers = #tpu.dot_dimension_numbers<[1], [0], [0], [1], [0, 0, 1, 1], [], []>} : vector<16x32xbf16>, vector<32x32xbf16>, vector<16x32xf32> -> vector<16x32xf32>
    %c0_9 = arith.constant 0 : index
    %c0_10 = arith.constant 0 : index
    %11 = vector.load %arg5[%c0_9, %c0_10] : memref<1x32xf32, #tpu.memory_space<vmem>>, vector<1x32xf32>
    %12 = vector.broadcast %11 : vector<1x32xf32> to vector<16x32xf32>
    %13 = arith.addf %10, %12 : vector<16x32xf32>
    %c0_11 = arith.constant 0 : index
    %c0_12 = arith.constant 0 : index
    %14 = vector.load %arg6[%c0_11, %c0_12] : memref<8x32xbf16, #tpu.memory_space<vmem>>, vector<8x32xbf16>
    %cst_13 = arith.constant dense<0.000000e+00> : vector<16x32xf32>
    %15 = tpu.matmul %0, %14, %cst_13 {dimension_numbers = #tpu.dot_dimension_numbers<[1], [0], [0], [1], [0, 0, 1, 1], [], []>} : vector<16x8xbf16>, vector<8x32xbf16>, vector<16x32xf32> -> vector<16x32xf32>
    %16 = arith.addf %13, %15 : vector<16x32xf32>
    %c0_14 = arith.constant 0 : index
    %c0_15 = arith.constant 0 : index
    %17 = vector.load %arg7[%c0_14, %c0_15] : memref<1x32xf32, #tpu.memory_space<vmem>>, vector<1x32xf32>
    %18 = vector.broadcast %17 : vector<1x32xf32> to vector<16x32xf32>
    %19 = arith.addf %16, %18 : vector<16x32xf32>
    %c0_16 = arith.constant 0 : index
    %c0_17 = arith.constant 0 : index
    %20 = vector.load %arg8[%c0_16, %c0_17] : memref<16x32xf32, #tpu.memory_space<vmem>>, vector<16x32xf32>
    tpu.vector_store %arg8[%c0_16, %c0_17], %19 {strides = array<i32>} : memref<16x32xf32, #tpu.memory_space<vmem>>, vector<16x32xf32>,
    return
  }
  func.func @transform_0(%arg0: i32) -> (i32, i32) {
    %c0_i32 = arith.constant 0 : i32
    %c0_i32_0 = arith.constant 0 : i32
    return %arg0, %c0_i32 : i32, i32
  }
  func.func @transform_1(%arg0: i32) -> (i32, i32) {
    %c0_i32 = arith.constant 0 : i32
    %c0_i32_0 = arith.constant 0 : i32
    %c0_i32_1 = arith.constant 0 : i32
    return %c0_i32, %c0_i32_0 : i32, i32
  }
  func.func @transform_2(%arg0: i32) -> (i32, i32) {
    %c0_i32 = arith.constant 0 : i32
    %c0_i32_0 = arith.constant 0 : i32
    %c0_i32_1 = arith.constant 0 : i32
    return %c0_i32, %c0_i32_0 : i32, i32
  }
  func.func @transform_3(%arg0: i32) -> (i32, i32) {
    %c0_i32 = arith.constant 0 : i32
    %c0_i32_0 = arith.constant 0 : i32
    %c0_i32_1 = arith.constant 0 : i32
    return %c0_i32, %c0_i32_0 : i32, i32
  }
  func.func @transform_4(%arg0: i32) -> (i32, i32) {
    %c0_i32 = arith.constant 0 : i32
    %c0_i32_0 = arith.constant 0 : i32
    %c0_i32_1 = arith.constant 0 : i32
    return %c0_i32, %c0_i32_0 : i32, i32
  }
  func.func @transform_5(%arg0: i32) -> (i32, i32) {
    %c0_i32 = arith.constant 0 : i32
    %c0_i32_0 = arith.constant 0 : i32
    %c0_i32_1 = arith.constant 0 : i32
    return %c0_i32, %c0_i32_0 : i32, i32
  }
  func.func @transform_6(%arg0: i32) -> (i32, i32) {
    %c0_i32 = arith.constant 0 : i32
    %c0_i32_0 = arith.constant 0 : i32
    %c0_i32_1 = arith.constant 0 : i32
    return %c0_i32, %c0_i32_0 : i32, i32
  }
  func.func @transform_7(%arg0: i32) -> (i32, i32) {
    %c0_i32 = arith.constant 0 : i32
    %c0_i32_0 = arith.constant 0 : i32
    return %arg0, %c0_i32 : i32, i32
  }
}

</mosaic_0001>

<llo_original>
// kernel: tpu_custom_call.1
$region0: #{tpu_custom_call.1}
  #allocation0 [shape = 'u32[]', space=smem, size = 0x4, offset = 0x4, fixed_abs, tag = 'smem constant byte address 0x4 - core index']
  #allocation1 [shape = 'u32[144,128]{1,0:T(1,128)}', space=vmem, size = 0x12000, scoped, tag = 'internal scratch']
  %s0 = inlined_call_operand.vmem [shape: bf16[16,8], index: 0, kind: input, shape index: {}]
  %s1 = inlined_call_operand.vmem [shape: bf16[8,32], index: 1, kind: input, shape index: {}]
  %s2 = inlined_call_operand.vmem [shape: f32[1,32], index: 2, kind: input, shape index: {}]
  %s3 = inlined_call_operand.vmem [shape: bf16[32,32], index: 3, kind: input, shape index: {}]
  %s4 = inlined_call_operand.vmem [shape: f32[1,32], index: 4, kind: input, shape index: {}]
  %s5 = inlined_call_operand.vmem [shape: bf16[8,32], index: 5, kind: input, shape index: {}]
  %s6 = inlined_call_operand.vmem [shape: f32[1,32], index: 6, kind: input, shape index: {}]
  %s7 = inlined_call_operand.hbm [shape: f32[16,32], index: 7, kind: output, shape index: {}]
  %s8 = sld [smem:[#allocation0]]
  $region38: #{tpu_custom_call.1} parent=0
    _
  %s10 = ssub.s32 1, %s8
  %s11 = scalar_select 0, %s10, %s8
  $region1: #{tpu_custom_call.1} parent=0
    #allocation2 [shape = 'u8[8192]{0}', space=vmem, size = 0x2000, scoped, tag = 'output window, operand 0, single buffered']
    #allocation3 [shape = 's32[1]{0}', space=sflag, size = 0x4, scoped, tag = 'scoped memory for tpu_custom_call.1']
    %12 = vsyncpa [#allocation3], 0
    // Predicated region
    $region2: #{tpu_custom_call.1} parent=1 // pred_check
      _
    $region3: #{tpu_custom_call.1} parent=1 // pred_check_branch
      %14 = sbr.rel (0) target = $region5
    $region4: #{tpu_custom_call.1} parent=1 // pred_region
      _
    $region5: #{tpu_custom_call.1} parent=1 // pred_fallthru
      _
    // Predicated region
    $region6: #{tpu_custom_call.1} parent=1 // pred_check
      _
    $region7: #{tpu_custom_call.1} parent=1 // pred_check_branch
      %16 = sbr.rel (0) target = $region9
    $region8: #{tpu_custom_call.1} parent=1 // pred_region
      _
    $region9: #{tpu_custom_call.1} parent=1 // pred_fallthru
      _
    // Predicated region
    $region10: #{tpu_custom_call.1} parent=1 // pred_check
      _
    $region11: #{tpu_custom_call.1} parent=1 // pred_check_branch
      %18 = sbr.rel (0) target = $region13
    $region12: #{tpu_custom_call.1} parent=1 // pred_region
      _
    $region13: #{tpu_custom_call.1} parent=1 // pred_fallthru
      _
    // Predicated region
    $region14: #{tpu_custom_call.1} parent=1 // pred_check
      _
    $region15: #{tpu_custom_call.1} parent=1 // pred_check_branch
      %20 = sbr.rel (0) target = $region17
    $region16: #{tpu_custom_call.1} parent=1 // pred_region
      _
    $region17: #{tpu_custom_call.1} parent=1 // pred_fallthru
      _
    // Predicated region
    $region18: #{tpu_custom_call.1} parent=1 // pred_check
      _
    $region19: #{tpu_custom_call.1} parent=1 // pred_check_branch
      %22 = sbr.rel (0) target = $region21
    $region20: #{tpu_custom_call.1} parent=1 // pred_region
      _
    $region21: #{tpu_custom_call.1} parent=1 // pred_fallthru
      _
    // Predicated region
    $region22: #{tpu_custom_call.1} parent=1 // pred_check
      _
    $region23: #{tpu_custom_call.1} parent=1 // pred_check_branch
      %24 = sbr.rel (0) target = $region25
    $region24: #{tpu_custom_call.1} parent=1 // pred_region
      _
    $region25: #{tpu_custom_call.1} parent=1 // pred_fallthru
      _
    // Predicated region
    $region26: #{tpu_custom_call.1} parent=1 // pred_check
      _
    $region27: #{tpu_custom_call.1} parent=1 // pred_check_branch
      %26 = sbr.rel (0) target = $region29
    $region28: #{tpu_custom_call.1} parent=1 // pred_region
      _
    $region29: #{tpu_custom_call.1} parent=1 // pred_fallthru
      _
    %v28 = vld [vmem:[%s0] sm:$0xf]
    %v29 = vld [vmem:[%s0 + $0x4] sm:$0xf]
    %v30 = vld [vmem:[%s1] sm:$0xf]
    %v31 = vld [vmem:[%s2] sm:$0x1]
    %v33 = vlaneseq
    %v34 = vshrl.u32 %v33, 7
    %v35 = vsub.s32 0, %v34
    %v36 = vrot.slane %v31, %v35
    %v40 = vunpack.c.l.b16 %v28
    %v41 = vunpack.c.l.b16 %v29
    %v42 = vpack.c.b16 %v41, %v40
    %vm43 = vcmask 64512
    %v45 = vsel %vm43, %v42, 0
    %vm47 = vcmask 1043456
    %v49 = vsel %vm47, %v30, 0
    %51 = vmatprep.subr.bf16.mxu0 0
    %52 = vmatpush1.bf16.msra.mxu0 %v49
    %53 = vmatprep.subr.bf16.mxu0 0
    %54 = vmatpush1.bf16.msra.mxu0 0
    %55 = vmatprep.subr.bf16.mxu0 0
    %56 = vmatpush1.bf16.msra.mxu0 0
    %57 = vmatprep.subr.bf16.mxu0 0
    %58 = vmatpush1.bf16.msra.mxu0 0
    %59 = vmatprep.subr.bf16.mxu0 0
    %60 = vmatpush1.bf16.msra.mxu0 0
    %61 = vmatprep.subr.bf16.mxu0 0
    %62 = vmatpush1.bf16.msra.mxu0 0
    %63 = vmatprep.subr.bf16.mxu0 0
    %64 = vmatpush1.bf16.msra.mxu0 0
    %65 = vmatprep.subr.bf16.mxu0 0
    %66 = vmatpush1.bf16.msra.mxu0 0
    %67 = vmatprep.subr.bf16.mxu0 0
    %68 = vmatpush1.bf16.msra.mxu0 0
    %69 = vmatprep.subr.bf16.mxu0 0
    %70 = vmatpush1.bf16.msra.mxu0 0
    %71 = vmatprep.subr.bf16.mxu0 0
    %72 = vmatpush1.bf16.msra.mxu0 0
    %73 = vmatprep.subr.bf16.mxu0 0
    %74 = vmatpush1.bf16.msra.mxu0 0
    %75 = vmatprep.subr.bf16.mxu0 0
    %76 = vmatpush1.bf16.msra.mxu0 0
    %77 = vmatprep.subr.bf16.mxu0 0
    %78 = vmatpush1.bf16.msra.mxu0 0
    %79 = vmatprep.subr.bf16.mxu0 0
    %80 = vmatpush1.bf16.msra.mxu0 0
    %81 = vmatprep.subr.bf16.mxu0 0
    %82 = vmatpush1.bf16.msra.mxu0 0
    %83 = vmatprep.mubr.bf16.mxu0 0
    %84 = vmatmul.mubr.bf16.gmra.mrb[0].mxu0 %v45
    %v85 = vpop.f32.mrb[0].mxu0
    %v86 = vadd.f32 %v36, %v85
    %v87 = vpop.f32.mrb[0].mxu0
    %v88 = vpop.f32.mrb[0].mxu0
    %v89 = vadd.f32 %v36, %v88
    %v90 = vpop.f32.mrb[0].mxu0
    %91 = vdwg.mxu0
    %v92 = vmax.f32 %v86, 0.0
    %v93 = vmax.f32 %v89, 0.0
    %v94 = vpack.c.bf16 %v93, %v92
    %v95 = vld [vmem:[%s3] sm:$0xf]
    %v96 = vld [vmem:[%s3 + $0x4] sm:$0xf]
    %v97 = vld [vmem:[%s3 + $0x8] sm:$0xf]
    %v98 = vld [vmem:[%s3 + $0xc] sm:$0xf]
    %v99 = vld [vmem:[%s4] sm:$0x1]
    %v101 = vlaneseq
    %v102 = vshrl.u32 %v101, 7
    %v103 = vsub.s32 0, %v102
    %v104 = vrot.slane %v99, %v103
    %v110 = vunpack.c.l.b16 %v95
    %v111 = vunpack.c.l.b16 %v96
    %v112 = vunpack.c.l.b16 %v97
    %v113 = vunpack.c.l.b16 %v98
    %v114 = vpack.c.b16 %v111, %v110
    %v115 = vpack.c.b16 %v113, %v112
    %vm118 = vcmask 261120
    %v120 = vsel %vm118, %v94, 0
    %122 = vmatprep.subr.bf16.mxu0 0
    %123 = vmatpush1.bf16.msra.mxu0 %v114
    %124 = vmatprep.subr.bf16.mxu0 0
    %125 = vmatpush1.bf16.msra.mxu0 %v115
    %126 = vmatprep.subr.bf16.mxu0 0
    %127 = vmatpush1.bf16.msra.mxu0 0
    %128 = vmatprep.subr.bf16.mxu0 0
    %129 = vmatpush1.bf16.msra.mxu0 0
    %130 = vmatprep.subr.bf16.mxu0 0
    %131 = vmatpush1.bf16.msra.mxu0 0
    %132 = vmatprep.subr.bf16.mxu0 0
    %133 = vmatpush1.bf16.msra.mxu0 0
    %134 = vmatprep.subr.bf16.mxu0 0
    %135 = vmatpush1.bf16.msra.mxu0 0
    %136 = vmatprep.subr.bf16.mxu0 0
    %137 = vmatpush1.bf16.msra.mxu0 0
    %138 = vmatprep.subr.bf16.mxu0 0
    %139 = vmatpush1.bf16.msra.mxu0 0
    %140 = vmatprep.subr.bf16.mxu0 0
    %141 = vmatpush1.bf16.msra.mxu0 0
    %142 = vmatprep.subr.bf16.mxu0 0
    %143 = vmatpush1.bf16.msra.mxu0 0
    %144 = vmatprep.subr.bf16.mxu0 0
    %145 = vmatpush1.bf16.msra.mxu0 0
    %146 = vmatprep.subr.bf16.mxu0 0
    %147 = vmatpush1.bf16.msra.mxu0 0
    %148 = vmatprep.subr.bf16.mxu0 0
    %149 = vmatpush1.bf16.msra.mxu0 0
    %150 = vmatprep.subr.bf16.mxu0 0
    %151 = vmatpush1.bf16.msra.mxu0 0
    %152 = vmatprep.subr.bf16.mxu0 0
    %153 = vmatpush1.bf16.msra.mxu0 0
    %154 = vmatprep.mubr.bf16.mxu0 0
    %155 = vmatmul.mubr.bf16.gmra.mrb[0].mxu0 %v120
    %v156 = vpop.f32.mrb[0].mxu0
    %v157 = vadd.f32 %v104, %v156
    %v158 = vpop.f32.mrb[0].mxu0
    %v159 = vpop.f32.mrb[0].mxu0
    %v160 = vadd.f32 %v104, %v159
    %v161 = vpop.f32.mrb[0].mxu0
    %162 = vdwg.mxu0
    %v163 = vld [vmem:[%s5] sm:$0xf]
    %v165 = vsel %vm47, %v163, 0
    %167 = vmatprep.subr.bf16.mxu0 0
    %168 = vmatpush1.bf16.msra.mxu0 %v165
    %169 = vmatprep.subr.bf16.mxu0 0
    %170 = vmatpush1.bf16.msra.mxu0 0
    %171 = vmatprep.subr.bf16.mxu0 0
    %172 = vmatpush1.bf16.msra.mxu0 0
    %173 = vmatprep.subr.bf16.mxu0 0
    %174 = vmatpush1.bf16.msra.mxu0 0
    %175 = vmatprep.subr.bf16.mxu0 0
    %176 = vmatpush1.bf16.msra.mxu0 0
    %177 = vmatprep.subr.bf16.mxu0 0
    %178 = vmatpush1.bf16.msra.mxu0 0
    %179 = vmatprep.subr.bf16.mxu0 0
    %180 = vmatpush1.bf16.msra.mxu0 0
    %181 = vmatprep.subr.bf16.mxu0 0
    %182 = vmatpush1.bf16.msra.mxu0 0
    %183 = vmatprep.subr.bf16.mxu0 0
    %184 = vmatpush1.bf16.msra.mxu0 0
    %185 = vmatprep.subr.bf16.mxu0 0
    %186 = vmatpush1.bf16.msra.mxu0 0
    %187 = vmatprep.subr.bf16.mxu0 0
    %188 = vmatpush1.bf16.msra.mxu0 0
    %189 = vmatprep.subr.bf16.mxu0 0
    %190 = vmatpush1.bf16.msra.mxu0 0
    %191 = vmatprep.subr.bf16.mxu0 0
    %192 = vmatpush1.bf16.msra.mxu0 0
    %193 = vmatprep.subr.bf16.mxu0 0
    %194 = vmatpush1.bf16.msra.mxu0 0
    %195 = vmatprep.subr.bf16.mxu0 0
    %196 = vmatpush1.bf16.msra.mxu0 0
    %197 = vmatprep.subr.bf16.mxu0 0
    %198 = vmatpush1.bf16.msra.mxu0 0
    %199 = vmatprep.mubr.bf16.mxu0 0
    %200 = vmatmul.mubr.bf16.gmra.mrb[0].mxu0 %v45
    %v201 = vpop.f32.mrb[0].mxu0
    %v202 = vadd.f32 0.0, %v201
    %v203 = vpop.f32.mrb[0].mxu0
    %v204 = vpop.f32.mrb[0].mxu0
    %v205 = vadd.f32 0.0, %v204
    %v206 = vpop.f32.mrb[0].mxu0
    %207 = vdwg.mxu0
    %v208 = vadd.f32 %v157, %v202
    %v209 = vadd.f32 %v160, %v205
    %v210 = vld [vmem:[%s6] sm:$0x1]
    %v212 = vlaneseq
    %v213 = vshrl.u32 %v212, 7
    %v214 = vsub.s32 0, %v213
    %v215 = vrot.slane %v210, %v214
    %v217 = vadd.f32 %v208, %v215
    %v218 = vadd.f32 %v209, %v215
    %219 = vst.msk [vmem:[#allocation2] sm:$0xff] %vm118, %v217
    %220 = vst.msk [vmem:[#allocation2 + $0x8] sm:$0xff] %vm118, %v218
    // Predicated region
    $region30: #{tpu_custom_call.1} parent=1 // pred_check
      _
    $region31: #{tpu_custom_call.1} parent=1 // pred_check_branch
      %222 = sbr.rel (0) target = $region33
    $region32: #{tpu_custom_call.1} parent=1 // pred_region
      %s224 = ssub.s32 256, 256
      %225 = vsyncadd [#allocation3], %s224
      %s226 = sshll.u32 [#allocation2], 4
      %s227 = int_to_ptr.vmem [resolvable:$true] %s226
      %232 = dma.vmem_to_hbm [thread:$0]  %s227, 256, %s7, [#allocation3], 128, 128, 8
    $region33: #{tpu_custom_call.1} parent=1 // pred_fallthru
      _
    // Predicated region
    $region34: #{tpu_custom_call.1} parent=1 // pred_check
      _
    $region35: #{tpu_custom_call.1} parent=1 // pred_check_branch
      %234 = sbr.rel (0) target = $region37
    $region36: #{tpu_custom_call.1} parent=1 // pred_region
      %235 = dma.done [#allocation3], 256
    $region37: #{tpu_custom_call.1} parent=1 // pred_fallthru
      _
    %236 = vsyncpa [#allocation3], 1

</llo_original>
